<compile_context>
chip_gen: v7x
topology: tpu7x:2x2x1
jax: 0.10.0
libtpu: 0.0.40
codegen_flags: <defaults>
</compile_context>

<pallas_src>
import jax
import jax.numpy as jnp
from jax import lax
from jax.experimental import pallas as pl
from jax.experimental.pallas import tpu as pltpu


def _round_up(x, m):
    return (x + m - 1) // m * m


def classifer_fwd_kernel(adj_ref, feat_ref, w1_ref, w2_ref, inv_deg_ref,
                         out_ref, emb_ref):
    adj = adj_ref[...]          # bf16 [N, N], binary with self-loops (exact in bf16)
    inv_deg = inv_deg_ref[...]  # f32  [N, 1], 1 / (in_degree + 1)
    dn = (((0,), (0,)), ((), ()))  # contract dim 0 of adj == A^T @ rhs, no transpose

    # ----- layer 1: h1 = relu((A^T(X W1) + X W1) * inv_deg) -----
    h1_self = jnp.dot(feat_ref[...], w1_ref[...],
                      preferred_element_type=jnp.float32)              # [N, Hp] f32
    h1_agg = lax.dot_general(adj, h1_self.astype(adj.dtype), dn,
                             preferred_element_type=jnp.float32)       # MXU, f32 acc
    h1 = jnp.maximum((h1_agg + h1_self) * inv_deg, 0.0)                # f32 epilogue
    emb_ref[...] = h1.astype(emb_ref.dtype)                            # self.embedding

    # ----- layer 2: out = relu((A^T(h1 W2) + h1 W2) * inv_deg) -----
    h2_self = jnp.dot(h1.astype(w2_ref.dtype), w2_ref[...],
                      preferred_element_type=jnp.float32)              # [N, Cp] f32
    h2_agg = lax.dot_general(adj, h2_self.astype(adj.dtype), dn,
                             preferred_element_type=jnp.float32)
    out_ref[...] = jnp.maximum((h2_agg + h2_self) * inv_deg, 0.0).astype(out_ref.dtype)


def precompute_graph(adj_f32):
    """Graph-static preprocessing, done once (analogous to g.ndata['d'])."""
    degs = jnp.sum(adj_f32, axis=0)                                    # in-degrees
    inv_deg = (1.0 / (degs + 1.0)).reshape(-1, 1).astype(jnp.float32)
    return adj_f32.astype(jnp.bfloat16), inv_deg                       # 0/1 -> exact bf16


def classifer_forward(adj_bf16, inv_deg, feat, w1, w2):
    n = adj_bf16.shape[0]
    in_dim, hidden = w1.shape
    num_classes = w2.shape[1]
    din_p = _round_up(in_dim, 128)
    h_p = _round_up(hidden, 128)
    c_p = _round_up(num_classes, 128)

    # Zero-pad feature/weight dims to lane-dense multiples of 128 (exact) and feed
    # the MXU bf16 operands.
    feat_p = jnp.pad(feat, ((0, 0), (0, din_p - in_dim))).astype(jnp.bfloat16)
    w1_p = jnp.pad(w1, ((0, din_p - in_dim), (0, h_p - hidden))).astype(jnp.bfloat16)
    w2_p = jnp.pad(w2, ((0, h_p - hidden), (0, c_p - num_classes))).astype(jnp.bfloat16)

    out_p, emb_p = pl.pallas_call(
        classifer_fwd_kernel,
        out_shape=(jax.ShapeDtypeStruct((n, c_p), jnp.float32),
                   jax.ShapeDtypeStruct((n, h_p), jnp.float32)),
        grid=(1,),
        in_specs=[
            pl.BlockSpec((n, n), lambda i: (0, 0)),
            pl.BlockSpec((n, din_p), lambda i: (0, 0)),
            pl.BlockSpec((din_p, h_p), lambda i: (0, 0)),
            pl.BlockSpec((h_p, c_p), lambda i: (0, 0)),
            pl.BlockSpec((n, 1), lambda i: (0, 0)),
        ],
        out_specs=(
            pl.BlockSpec((n, c_p), lambda i: (0, 0)),
            pl.BlockSpec((n, h_p), lambda i: (0, 0)),
        ),
        compiler_params=pltpu.CompilerParams(dimension_semantics=("arbitrary",)),
    )(adj_bf16, feat_p, w1_p, w2_p, inv_deg)

    return out_p[:, :num_classes], emb_p[:, :hidden]


if __name__ == "__main__":
    N, input_dim, hidden, num_classes = 128, 64, 200, 8

    key = jax.random.PRNGKey(0)
    k_feat, k_w1, k_w2, k_adj = jax.random.split(key, 4)

    feat = jax.random.normal(k_feat, (N, input_dim), dtype=jnp.float32)
    w1 = jax.random.normal(k_w1, (input_dim, hidden), dtype=jnp.float32)
    w2 = jax.random.normal(k_w2, (hidden, num_classes), dtype=jnp.float32)

    # Synthetic symmetric binary adjacency with self-loops (graph structure only).
    rand_edges = (jax.random.uniform(k_adj, (N, N)) < 0.10).astype(jnp.float32)
    adj = jnp.clip(rand_edges + rand_edges.T + jnp.eye(N, dtype=jnp.float32), 0.0, 1.0)

    adj_bf, inv_deg = precompute_graph(adj)          # once, graph is static
    out, emb = classifer_forward(adj_bf, inv_deg, feat, w1, w2)
    jax.block_until_ready(out)

    # Pure-JAX reference with the same bf16 operands / f32 accumulation.
    def reference(adj_b, inv_d, x, wa, wb):
        bf = jnp.bfloat16
        dn = (((0,), (0,)), ((), ()))
        h1s = jnp.dot(x.astype(bf), wa.astype(bf), preferred_element_type=jnp.float32)
        h1a = lax.dot_general(adj_b, h1s.astype(bf), dn, preferred_element_type=jnp.float32)
        h1 = jnp.maximum((h1a + h1s) * inv_d, 0.0)
        h2s = jnp.dot(h1.astype(bf), wb.astype(bf), preferred_element_type=jnp.float32)
        h2a = lax.dot_general(adj_b, h2s.astype(bf), dn, preferred_element_type=jnp.float32)
        return jnp.maximum((h2a + h2s) * inv_d, 0.0), h1

    ref_out, ref_emb = reference(adj_bf, inv_deg, feat, w1, w2)
    assert jnp.allclose(out, ref_out, atol=1e-2, rtol=1e-2), "output mismatch vs reference"
    assert jnp.allclose(emb, ref_emb, atol=1e-2, rtol=1e-2), "embedding mismatch vs reference"

    print("KERNEL_OK")
</pallas_src>

<mosaic_0001>
module attributes {stable_mosaic.version = 11 : i64} {
  func.func @classifer_fwd_kernel(%arg0: i32, %arg1: memref<128x128xbf16, #tpu.memory_space<vmem>>, %arg2: memref<128x128xbf16, #tpu.memory_space<vmem>>, %arg3: memref<128x256xbf16, #tpu.memory_space<vmem>>, %arg4: memref<256x128xbf16, #tpu.memory_space<vmem>>, %arg5: memref<128x1xf32, #tpu.memory_space<vmem>>, %arg6: memref<128x128xf32, #tpu.memory_space<vmem>>, %arg7: memref<128x256xf32, #tpu.memory_space<vmem>>) attributes {dimension_semantics = [#tpu.dimension_semantics<arbitrary>], iteration_bounds = array<i64: 1>, scalar_prefetch = 0 : i64, scratch_operands = 0 : i64, tpu.core_type = #tpu.core_type<tc>, window_params = [{pipeline_mode = #tpu.pipeline_mode<synchronous>, transform_indices = @transform_0, window_bounds = array<i64: 128, 128>}, {pipeline_mode = #tpu.pipeline_mode<synchronous>, transform_indices = @transform_1, window_bounds = array<i64: 128, 128>}, {pipeline_mode = #tpu.pipeline_mode<synchronous>, transform_indices = @transform_2, window_bounds = array<i64: 128, 256>}, {pipeline_mode = #tpu.pipeline_mode<synchronous>, transform_indices = @transform_3, window_bounds = array<i64: 256, 128>}, {pipeline_mode = #tpu.pipeline_mode<synchronous>, transform_indices = @transform_4, window_bounds = array<i64: 128, 1>}, {pipeline_mode = #tpu.pipeline_mode<synchronous>, transform_indices = @transform_5, window_bounds = array<i64: 128, 128>}, {pipeline_mode = #tpu.pipeline_mode<synchronous>, transform_indices = @transform_6, window_bounds = array<i64: 128, 256>}]} {
    %c0 = arith.constant 0 : index
    %c0_0 = arith.constant 0 : index
    %0 = vector.load %arg1[%c0, %c0_0] : memref<128x128xbf16, #tpu.memory_space<vmem>>, vector<128x128xbf16>
    %c0_1 = arith.constant 0 : index
    %c0_2 = arith.constant 0 : index
    %1 = vector.load %arg5[%c0_1, %c0_2] : memref<128x1xf32, #tpu.memory_space<vmem>>, vector<128x1xf32>
    %c0_3 = arith.constant 0 : index
    %c0_4 = arith.constant 0 : index
    %2 = vector.load %arg2[%c0_3, %c0_4] : memref<128x128xbf16, #tpu.memory_space<vmem>>, vector<128x128xbf16>
    %c0_5 = arith.constant 0 : index
    %c0_6 = arith.constant 0 : index
    %3 = vector.load %arg3[%c0_5, %c0_6] : memref<128x256xbf16, #tpu.memory_space<vmem>>, vector<128x256xbf16>
    %cst = arith.constant dense<0.000000e+00> : vector<128x256xf32>
    %4 = tpu.matmul %2, %3, %cst {dimension_numbers = #tpu.dot_dimension_numbers<[1], [0], [0], [1], [0, 0, 1, 1], [], []>} : vector<128x128xbf16>, vector<128x256xbf16>, vector<128x256xf32> -> vector<128x256xf32>
    %5 = arith.truncf %4 : vector<128x256xf32> to vector<128x256xbf16>
    %cst_7 = arith.constant dense<0.000000e+00> : vector<128x256xf32>
    %6 = tpu.matmul %0, %5, %cst_7 {dimension_numbers = #tpu.dot_dimension_numbers<[0], [0], [1], [1], [0, 1, 1, 1], [], []>} : vector<128x128xbf16>, vector<128x256xbf16>, vector<128x256xf32> -> vector<128x256xf32>
    %7 = arith.addf %6, %4 : vector<128x256xf32>
    %8 = vector.broadcast %1 : vector<128x1xf32> to vector<128x256xf32>
    %9 = arith.mulf %7, %8 : vector<128x256xf32>
    %cst_8 = arith.constant 0.000000e+00 : f32
    %10 = vector.broadcast %cst_8 : f32 to vector<128x256xf32>
    %11 = arith.maximumf %9, %10 : vector<128x256xf32>
    %c0_9 = arith.constant 0 : index
    %c0_10 = arith.constant 0 : index
    %12 = vector.load %arg7[%c0_9, %c0_10] : memref<128x256xf32, #tpu.memory_space<vmem>>, vector<128x256xf32>
    tpu.vector_store %arg7[%c0_9, %c0_10], %11 {strides = array<i32>} : memref<128x256xf32, #tpu.memory_space<vmem>>, vector<128x256xf32>,
    %13 = arith.truncf %11 : vector<128x256xf32> to vector<128x256xbf16>
    %c0_11 = arith.constant 0 : index
    %c0_12 = arith.constant 0 : index
    %14 = vector.load %arg4[%c0_11, %c0_12] : memref<256x128xbf16, #tpu.memory_space<vmem>>, vector<256x128xbf16>
    %cst_13 = arith.constant dense<0.000000e+00> : vector<128x128xf32>
    %15 = tpu.matmul %13, %14, %cst_13 {dimension_numbers = #tpu.dot_dimension_numbers<[1], [0], [0], [1], [0, 0, 1, 1], [], []>} : vector<128x256xbf16>, vector<256x128xbf16>, vector<128x128xf32> -> vector<128x128xf32>
    %16 = arith.truncf %15 : vector<128x128xf32> to vector<128x128xbf16>
    %cst_14 = arith.constant dense<0.000000e+00> : vector<128x128xf32>
    %17 = tpu.matmul %0, %16, %cst_14 {dimension_numbers = #tpu.dot_dimension_numbers<[0], [0], [1], [1], [0, 1, 1, 1], [], []>} : vector<128x128xbf16>, vector<128x128xbf16>, vector<128x128xf32> -> vector<128x128xf32>
    %18 = arith.addf %17, %15 : vector<128x128xf32>
    %19 = vector.broadcast %1 : vector<128x1xf32> to vector<128x128xf32>
    %20 = arith.mulf %18, %19 : vector<128x128xf32>
    %cst_15 = arith.constant 0.000000e+00 : f32
    %21 = vector.broadcast %cst_15 : f32 to vector<128x128xf32>
    %22 = arith.maximumf %20, %21 : vector<128x128xf32>
    %c0_16 = arith.constant 0 : index
    %c0_17 = arith.constant 0 : index
    %23 = vector.load %arg6[%c0_16, %c0_17] : memref<128x128xf32, #tpu.memory_space<vmem>>, vector<128x128xf32>
    tpu.vector_store %arg6[%c0_16, %c0_17], %22 {strides = array<i32>} : memref<128x128xf32, #tpu.memory_space<vmem>>, vector<128x128xf32>,
    return
  }
  func.func @transform_0(%arg0: i32) -> (i32, i32) {
    %c0_i32 = arith.constant 0 : i32
    %c0_i32_0 = arith.constant 0 : i32
    %c0_i32_1 = arith.constant 0 : i32
    return %c0_i32, %c0_i32_0 : i32, i32
  }
  func.func @transform_1(%arg0: i32) -> (i32, i32) {
    %c0_i32 = arith.constant 0 : i32
    %c0_i32_0 = arith.constant 0 : i32
    %c0_i32_1 = arith.constant 0 : i32
    return %c0_i32, %c0_i32_0 : i32, i32
  }
  func.func @transform_2(%arg0: i32) -> (i32, i32) {
    %c0_i32 = arith.constant 0 : i32
    %c0_i32_0 = arith.constant 0 : i32
    %c0_i32_1 = arith.constant 0 : i32
    return %c0_i32, %c0_i32_0 : i32, i32
  }
  func.func @transform_3(%arg0: i32) -> (i32, i32) {
    %c0_i32 = arith.constant 0 : i32
    %c0_i32_0 = arith.constant 0 : i32
    %c0_i32_1 = arith.constant 0 : i32
    return %c0_i32, %c0_i32_0 : i32, i32
  }
  func.func @transform_4(%arg0: i32) -> (i32, i32) {
    %c0_i32 = arith.constant 0 : i32
    %c0_i32_0 = arith.constant 0 : i32
    %c0_i32_1 = arith.constant 0 : i32
    return %c0_i32, %c0_i32_0 : i32, i32
  }
  func.func @transform_5(%arg0: i32) -> (i32, i32) {
    %c0_i32 = arith.constant 0 : i32
    %c0_i32_0 = arith.constant 0 : i32
    %c0_i32_1 = arith.constant 0 : i32
    return %c0_i32, %c0_i32_0 : i32, i32
  }
  func.func @transform_6(%arg0: i32) -> (i32, i32) {
    %c0_i32 = arith.constant 0 : i32
    %c0_i32_0 = arith.constant 0 : i32
    %c0_i32_1 = arith.constant 0 : i32
    return %c0_i32, %c0_i32_0 : i32, i32
  }
}

</mosaic_0001>

<llo_original>
// kernel: tpu_custom_call.1
$region0: #{tpu_custom_call.1}
  #allocation0 [shape = 'u32[]', space=smem, size = 0x4, offset = 0x4, fixed_abs, tag = 'smem constant byte address 0x4 - core index']
  #allocation1 [shape = 'u32[144,128]{1,0:T(1,128)}', space=vmem, size = 0x12000, scoped, tag = 'internal scratch']
  %s0 = inlined_call_operand.hbm [shape: bf16[128,128], index: 0, kind: input, shape index: {}]
  %s1 = inlined_call_operand.hbm [shape: bf16[128,128], index: 1, kind: input, shape index: {}]
  %s2 = inlined_call_operand.vmem [shape: bf16[128,256], index: 2, kind: input, shape index: {}]
  %s3 = inlined_call_operand.hbm [shape: bf16[256,128], index: 3, kind: input, shape index: {}]
  %s4 = inlined_call_operand.vmem [shape: f32[128,1], index: 4, kind: input, shape index: {}]
  %s5 = inlined_call_operand.hbm [shape: f32[128,128], index: 5, kind: output, shape index: {0}]
  %s6 = inlined_call_operand.hbm [shape: f32[128,256], index: 6, kind: output, shape index: {1}]
  %7 = xla_tuple %s5, %s6
  %s8 = sld [smem:[#allocation0]]
  $region50: #{tpu_custom_call.1} parent=0
    _
  %s10 = ssub.s32 1, %s8
  %s11 = scalar_select 0, %s10, %s8
  $region1: #{tpu_custom_call.1} parent=0
    #allocation2 [shape = 'u8[32768]{0}', space=vmem, size = 0x8000, scoped, tag = 'input window, operand 0, single buffered']
    #allocation3 [shape = 's32[1]{0}', space=sflag, size = 0x4, scoped, tag = 'scoped memory for tpu_custom_call.1']
    #allocation4 [shape = 's32[1]{0}', space=sflag, size = 0x4, scoped, tag = 'scoped memory for tpu_custom_call.1']
    #allocation5 [shape = 'u8[32768]{0}', space=vmem, size = 0x8000, scoped, tag = 'input window, operand 1, single buffered']
    #allocation6 [shape = 's32[1]{0}', space=sflag, size = 0x4, scoped, tag = 'scoped memory for tpu_custom_call.1']
    #allocation7 [shape = 'u8[65536]{0}', space=vmem, size = 0x10000, scoped, tag = 'input window, operand 3, single buffered']
    #allocation8 [shape = 'u8[65536]{0}', space=vmem, size = 0x10000, scoped, tag = 'output window, operand 0, single buffered']
    #allocation9 [shape = 'u8[131072]{0}', space=vmem, size = 0x20000, scoped, tag = 'output window, operand 1, single buffered']
    #allocation10 [shape = 's32[1]{0}', space=sflag, size = 0x4, scoped, tag = 'scoped memory for tpu_custom_call.1']
    %12 = vsyncpa [#allocation3], 0
    %13 = vsyncpa [#allocation6], 0
    %14 = vsyncpa [#allocation4], 0
    %15 = vsyncpa [#allocation10], 0
    // Predicated region
    $region2: #{tpu_custom_call.1} parent=1 // pred_check
      _
    $region3: #{tpu_custom_call.1} parent=1 // pred_check_branch
      %17 = sbr.rel (0) target = $region5
    $region4: #{tpu_custom_call.1} parent=1 // pred_region
      %s19 = ssub.s32 1024, 1024
      %20 = vsyncadd [#allocation3], %s19
      %s21 = sshll.u32 [#allocation2], 4
      %s22 = int_to_ptr.vmem [resolvable:$true] %s21
      %27 = dma.hbm_to_vmem [thread:$0]  %s0, 1024, %s22, [#allocation3], 64, 64, 4
    $region5: #{tpu_custom_call.1} parent=1 // pred_fallthru
      _
    // Predicated region
    $region6: #{tpu_custom_call.1} parent=1 // pred_check
      _
    $region7: #{tpu_custom_call.1} parent=1 // pred_check_branch
      %29 = sbr.rel (0) target = $region9
    $region8: #{tpu_custom_call.1} parent=1 // pred_region
      %s31 = ssub.s32 1024, 1024
      %32 = vsyncadd [#allocation6], %s31
      %s33 = sshll.u32 [#allocation5], 4
      %s34 = int_to_ptr.vmem [resolvable:$true] %s33
      %39 = dma.hbm_to_vmem [thread:$0]  %s1, 1024, %s34, [#allocation6], 64, 64, 4
    $region9: #{tpu_custom_call.1} parent=1 // pred_fallthru
      _
    // Predicated region
    $region10: #{tpu_custom_call.1} parent=1 // pred_check
      _
    $region11: #{tpu_custom_call.1} parent=1 // pred_check_branch
      %41 = sbr.rel (0) target = $region13
    $region12: #{tpu_custom_call.1} parent=1 // pred_region
      _
    $region13: #{tpu_custom_call.1} parent=1 // pred_fallthru
      _
    // Predicated region
    $region14: #{tpu_custom_call.1} parent=1 // pred_check
      _
    $region15: #{tpu_custom_call.1} parent=1 // pred_check_branch
      %43 = sbr.rel (0) target = $region17
    $region16: #{tpu_custom_call.1} parent=1 // pred_region
      %s45 = ssub.s32 2048, 2048
      %46 = vsyncadd [#allocation6], %s45
      %s47 = sshll.u32 [#allocation7], 4
      %s48 = int_to_ptr.vmem [resolvable:$true] %s47
      %53 = dma.hbm_to_vmem [thread:$0]  %s3, 2048, %s48, [#allocation6], 64, 64, 4
    $region17: #{tpu_custom_call.1} parent=1 // pred_fallthru
      _
    // Predicated region
    $region18: #{tpu_custom_call.1} parent=1 // pred_check
      _
    $region19: #{tpu_custom_call.1} parent=1 // pred_check_branch
      %55 = sbr.rel (0) target = $region21
    $region20: #{tpu_custom_call.1} parent=1 // pred_region
      _
    $region21: #{tpu_custom_call.1} parent=1 // pred_fallthru
      _
    // Predicated region
    $region22: #{tpu_custom_call.1} parent=1 // pred_check
      _
    $region23: #{tpu_custom_call.1} parent=1 // pred_check_branch
      %57 = sbr.rel (0) target = $region25
    $region24: #{tpu_custom_call.1} parent=1 // pred_region
      %58 = dma.done [#allocation3], 1024
    $region25: #{tpu_custom_call.1} parent=1 // pred_fallthru
      _
    // Predicated region
    $region26: #{tpu_custom_call.1} parent=1 // pred_check
      _
    $region27: #{tpu_custom_call.1} parent=1 // pred_check_branch
      %60 = sbr.rel (0) target = $region29
    $region28: #{tpu_custom_call.1} parent=1 // pred_region
      %61 = dma.done [#allocation6], 1024
    $region29: #{tpu_custom_call.1} parent=1 // pred_fallthru
      _
    // Predicated region
    $region30: #{tpu_custom_call.1} parent=1 // pred_check
      _
    $region31: #{tpu_custom_call.1} parent=1 // pred_check_branch
      %63 = sbr.rel (0) target = $region33
    $region32: #{tpu_custom_call.1} parent=1 // pred_region
      %64 = dma.done [#allocation6], 2048
    $region33: #{tpu_custom_call.1} parent=1 // pred_fallthru
      _
    %v66 = vld [vmem:[#allocation2] sm:$0xf]
    %v67 = vld [vmem:[#allocation2 + $0x4] sm:$0xf]
    %v68 = vld [vmem:[#allocation2 + $0x8] sm:$0xf]
    %v69 = vld [vmem:[#allocation2 + $0xc] sm:$0xf]
    %v70 = vld [vmem:[#allocation2 + $0x10] sm:$0xf]
    %v71 = vld [vmem:[#allocation2 + $0x14] sm:$0xf]
    %v72 = vld [vmem:[#allocation2 + $0x18] sm:$0xf]
    %v73 = vld [vmem:[#allocation2 + $0x1c] sm:$0xf]
    %v74 = vld [vmem:[#allocation2 + $0x20] sm:$0xf]
    %v75 = vld [vmem:[#allocation2 + $0x24] sm:$0xf]
    %v76 = vld [vmem:[#allocation2 + $0x28] sm:$0xf]
    %v77 = vld [vmem:[#allocation2 + $0x2c] sm:$0xf]
    %v78 = vld [vmem:[#allocation2 + $0x30] sm:$0xf]
    %v79 = vld [vmem:[#allocation2 + $0x34] sm:$0xf]
    %v80 = vld [vmem:[#allocation2 + $0x38] sm:$0xf]
    %v81 = vld [vmem:[#allocation2 + $0x3c] sm:$0xf]
    %v82 = vld [vmem:[%s4] sm:$0xff]
    %v83 = vld [vmem:[%s4 + $0x8] sm:$0xff]
    %v84 = vld [vmem:[%s4 + $0x10] sm:$0xff]
    %v85 = vld [vmem:[%s4 + $0x18] sm:$0xff]
    %v86 = vld [vmem:[%s4 + $0x20] sm:$0xff]
    %v87 = vld [vmem:[%s4 + $0x28] sm:$0xff]
    %v88 = vld [vmem:[%s4 + $0x30] sm:$0xff]
    %v89 = vld [vmem:[%s4 + $0x38] sm:$0xff]
    %v90 = vld [vmem:[%s4 + $0x40] sm:$0xff]
    %v91 = vld [vmem:[%s4 + $0x48] sm:$0xff]
    %v92 = vld [vmem:[%s4 + $0x50] sm:$0xff]
    %v93 = vld [vmem:[%s4 + $0x58] sm:$0xff]
    %v94 = vld [vmem:[%s4 + $0x60] sm:$0xff]
    %v95 = vld [vmem:[%s4 + $0x68] sm:$0xff]
    %v96 = vld [vmem:[%s4 + $0x70] sm:$0xff]
    %v97 = vld [vmem:[%s4 + $0x78] sm:$0xff]
    %v98 = vld [vmem:[#allocation5] sm:$0xf]
    %v99 = vld [vmem:[#allocation5 + $0x4] sm:$0xf]
    %v100 = vld [vmem:[#allocation5 + $0x8] sm:$0xf]
    %v101 = vld [vmem:[#allocation5 + $0xc] sm:$0xf]
    %v102 = vld [vmem:[#allocation5 + $0x10] sm:$0xf]
    %v103 = vld [vmem:[#allocation5 + $0x14] sm:$0xf]
    %v104 = vld [vmem:[#allocation5 + $0x18] sm:$0xf]
    %v105 = vld [vmem:[#allocation5 + $0x1c] sm:$0xf]
    %v106 = vld [vmem:[#allocation5 + $0x20] sm:$0xf]
    %v107 = vld [vmem:[#allocation5 + $0x24] sm:$0xf]
    %v108 = vld [vmem:[#allocation5 + $0x28] sm:$0xf]
    %v109 = vld [vmem:[#allocation5 + $0x2c] sm:$0xf]
    %v110 = vld [vmem:[#allocation5 + $0x30] sm:$0xf]
    %v111 = vld [vmem:[#allocation5 + $0x34] sm:$0xf]
    %v112 = vld [vmem:[#allocation5 + $0x38] sm:$0xf]
    %v113 = vld [vmem:[#allocation5 + $0x3c] sm:$0xf]
    %v114 = vld [vmem:[%s2] sm:$0xff]
    %v115 = vld [vmem:[%s2 + $0x8] sm:$0xff]
    %v116 = vld [vmem:[%s2 + $0x10] sm:$0xff]
    %v117 = vld [vmem:[%s2 + $0x18] sm:$0xff]
    %v118 = vld [vmem:[%s2 + $0x20] sm:$0xff]
    %v119 = vld [vmem:[%s2 + $0x28] sm:$0xff]
    %v120 = vld [vmem:[%s2 + $0x30] sm:$0xff]
    %v121 = vld [vmem:[%s2 + $0x38] sm:$0xff]
    %v122 = vld [vmem:[%s2 + $0x40] sm:$0xff]
    %v123 = vld [vmem:[%s2 + $0x48] sm:$0xff]
    %v124 = vld [vmem:[%s2 + $0x50] sm:$0xff]
    %v125 = vld [vmem:[%s2 + $0x58] sm:$0xff]
    %v126 = vld [vmem:[%s2 + $0x60] sm:$0xff]
    %v127 = vld [vmem:[%s2 + $0x68] sm:$0xff]
    %v128 = vld [vmem:[%s2 + $0x70] sm:$0xff]
    %v129 = vld [vmem:[%s2 + $0x78] sm:$0xff]
    %v146 = vunpack.c.l.b16 %v98
    %v147 = vunpack.c.l.b16 %v99
    %v148 = vunpack.c.l.b16 %v100
    %v149 = vunpack.c.l.b16 %v101
    %v150 = vunpack.c.l.b16 %v102
    %v151 = vunpack.c.l.b16 %v103
    %v152 = vunpack.c.l.b16 %v104
    %v153 = vunpack.c.l.b16 %v105
    %v154 = vunpack.c.l.b16 %v106
    %v155 = vunpack.c.l.b16 %v107
    %v156 = vunpack.c.l.b16 %v108
    %v157 = vunpack.c.l.b16 %v109
    %v158 = vunpack.c.l.b16 %v110
    %v159 = vunpack.c.l.b16 %v111
    %v160 = vunpack.c.l.b16 %v112
    %v161 = vunpack.c.l.b16 %v113
    %v162 = vpack.c.b16 %v147, %v146
    %v163 = vpack.c.b16 %v149, %v148
    %v164 = vpack.c.b16 %v151, %v150
    %v165 = vpack.c.b16 %v153, %v152
    %v166 = vpack.c.b16 %v155, %v154
    %v167 = vpack.c.b16 %v157, %v156
    %v168 = vpack.c.b16 %v159, %v158
    %v169 = vpack.c.b16 %v161, %v160
    %v194 = vunpack.c.l.b16 %v114
    %v195 = vunpack.c.h.b16 %v114
    %v196 = vunpack.c.l.b16 %v115
    %v197 = vunpack.c.h.b16 %v115
    %v198 = vunpack.c.l.b16 %v116
    %v199 = vunpack.c.h.b16 %v116
    %v200 = vunpack.c.l.b16 %v117
    %v201 = vunpack.c.h.b16 %v117
    %v202 = vunpack.c.l.b16 %v118
    %v203 = vunpack.c.h.b16 %v118
    %v204 = vunpack.c.l.b16 %v119
    %v205 = vunpack.c.h.b16 %v119
    %v206 = vunpack.c.l.b16 %v120
    %v207 = vunpack.c.h.b16 %v120
    %v208 = vunpack.c.l.b16 %v121
    %v209 = vunpack.c.h.b16 %v121
    %v210 = vunpack.c.l.b16 %v122
    %v211 = vunpack.c.h.b16 %v122
    %v212 = vunpack.c.l.b16 %v123
    %v213 = vunpack.c.h.b16 %v123
    %v214 = vunpack.c.l.b16 %v124
    %v215 = vunpack.c.h.b16 %v124
    %v216 = vunpack.c.l.b16 %v125
    %v217 = vunpack.c.h.b16 %v125
    %v218 = vunpack.c.l.b16 %v126
    %v219 = vunpack.c.h.b16 %v126
    %v220 = vunpack.c.l.b16 %v127
    %v221 = vunpack.c.h.b16 %v127
    %v222 = vunpack.c.l.b16 %v128
    %v223 = vunpack.c.h.b16 %v128
    %v224 = vunpack.c.l.b16 %v129
    %v225 = vunpack.c.h.b16 %v129
    %v226 = vpack.c.b16 %v196, %v194
    %v227 = vpack.c.b16 %v197, %v195
    %v228 = vpack.c.b16 %v200, %v198
    %v229 = vpack.c.b16 %v201, %v199
    %v230 = vpack.c.b16 %v204, %v202
    %v231 = vpack.c.b16 %v205, %v203
    %v232 = vpack.c.b16 %v208, %v206
    %v233 = vpack.c.b16 %v209, %v207
    %v234 = vpack.c.b16 %v212, %v210
    %v235 = vpack.c.b16 %v213, %v211
    %v236 = vpack.c.b16 %v216, %v214
    %v237 = vpack.c.b16 %v217, %v215
    %v238 = vpack.c.b16 %v220, %v218
    %v239 = vpack.c.b16 %v221, %v219
    %v240 = vpack.c.b16 %v224, %v222
    %v241 = vpack.c.b16 %v225, %v223
    %258 = vmatprep.subr.bf16.mxu0 %v227
    %259 = vmatpush1.bf16.msra.mxu0 %v226
    %260 = vmatprep.subr.bf16.mxu0 %v229
    %261 = vmatpush1.bf16.msra.mxu0 %v228
    %262 = vmatprep.subr.bf16.mxu0 %v231
    %263 = vmatpush1.bf16.msra.mxu0 %v230
    %264 = vmatprep.subr.bf16.mxu0 %v233
    %265 = vmatpush1.bf16.msra.mxu0 %v232
    %266 = vmatprep.subr.bf16.mxu0 %v235
    %267 = vmatpush1.bf16.msra.mxu0 %v234
    %268 = vmatprep.subr.bf16.mxu0 %v237
    %269 = vmatpush1.bf16.msra.mxu0 %v236
    %270 = vmatprep.subr.bf16.mxu0 %v239
    %271 = vmatpush1.bf16.msra.mxu0 %v238
    %272 = vmatprep.subr.bf16.mxu0 %v241
    %273 = vmatpush1.bf16.msra.mxu0 %v240
    %274 = vmatprep.subr.bf16.mxu0 0
    %275 = vmatpush1.bf16.msra.mxu0 0
    %276 = vmatprep.subr.bf16.mxu0 0
    %277 = vmatpush1.bf16.msra.mxu0 0
    %278 = vmatprep.subr.bf16.mxu0 0
    %279 = vmatpush1.bf16.msra.mxu0 0
    %280 = vmatprep.subr.bf16.mxu0 0
    %281 = vmatpush1.bf16.msra.mxu0 0
    %282 = vmatprep.subr.bf16.mxu0 0
    %283 = vmatpush1.bf16.msra.mxu0 0
    %284 = vmatprep.subr.bf16.mxu0 0
    %285 = vmatpush1.bf16.msra.mxu0 0
    %286 = vmatprep.subr.bf16.mxu0 0
    %287 = vmatpush1.bf16.msra.mxu0 0
    %288 = vmatprep.subr.bf16.mxu0 0
    %289 = vmatpush1.bf16.msra.mxu0 0
    %290 = vmatprep.mubr.bf16.mxu0 0
    %291 = vmatmul.mubr.bf16.gmra.mrb[0].mxu0 %v162
    %v292 = vpop.f32.mrb[0].mxu0
    %v293 = vadd.f32 0.0, %v292
    %v294 = vpop.f32.mrb[0].mxu0
    %v295 = vadd.f32 0.0, %v294
    %v296 = vpop.f32.mrb[0].mxu0
    %v297 = vadd.f32 0.0, %v296
    %v298 = vpop.f32.mrb[0].mxu0
    %v299 = vadd.f32 0.0, %v298
    %300 = vmatprep.mubr.bf16.mxu0 0
    %301 = vmatmul.mubr.bf16.gmra.mrb[0].mxu0 %v163
    %v302 = vpop.f32.mrb[0].mxu0
    %v303 = vadd.f32 0.0, %v302
    %v304 = vpop.f32.mrb[0].mxu0
    %v305 = vadd.f32 0.0, %v304
    %v306 = vpop.f32.mrb[0].mxu0
    %v307 = vadd.f32 0.0, %v306
    %v308 = vpop.f32.mrb[0].mxu0
    %v309 = vadd.f32 0.0, %v308
    %310 = vmatprep.mubr.bf16.mxu0 0
    %311 = vmatmul.mubr.bf16.gmra.mrb[0].mxu0 %v164
    %v312 = vpop.f32.mrb[0].mxu0
    %v313 = vadd.f32 0.0, %v312
    %v314 = vpop.f32.mrb[0].mxu0
    %v315 = vadd.f32 0.0, %v314
    %v316 = vpop.f32.mrb[0].mxu0
    %v317 = vadd.f32 0.0, %v316
    %v318 = vpop.f32.mrb[0].mxu0
    %v319 = vadd.f32 0.0, %v318
    %320 = vmatprep.mubr.bf16.mxu0 0
    %321 = vmatmul.mubr.bf16.gmra.mrb[0].mxu0 %v165
    %v322 = vpop.f32.mrb[0].mxu0
    %v323 = vadd.f32 0.0, %v322
    %v324 = vpop.f32.mrb[0].mxu0
    %v325 = vadd.f32 0.0, %v324
    %v326 = vpop.f32.mrb[0].mxu0
    %v327 = vadd.f32 0.0, %v326
    %v328 = vpop.f32.mrb[0].mxu0
    %v329 = vadd.f32 0.0, %v328
    %330 = vmatprep.mubr.bf16.mxu0 0
    %331 = vmatmul.mubr.bf16.gmra.mrb[0].mxu0 %v166
    %v332 = vpop.f32.mrb[0].mxu0
    %v333 = vadd.f32 0.0, %v332
    %v334 = vpop.f32.mrb[0].mxu0
    %v335 = vadd.f32 0.0, %v334
    %v336 = vpop.f32.mrb[0].mxu0
    %v337 = vadd.f32 0.0, %v336
    %v338 = vpop.f32.mrb[0].mxu0
    %v339 = vadd.f32 0.0, %v338
    %340 = vmatprep.mubr.bf16.mxu0 0
    %341 = vmatmul.mubr.bf16.gmra.mrb[0].mxu0 %v167
    %v342 = vpop.f32.mrb[0].mxu0
    %v343 = vadd.f32 0.0, %v342
    %v344 = vpop.f32.mrb[0].mxu0
    %v345 = vadd.f32 0.0, %v344
    %v346 = vpop.f32.mrb[0].mxu0
    %v347 = vadd.f32 0.0, %v346
    %v348 = vpop.f32.mrb[0].mxu0
    %v349 = vadd.f32 0.0, %v348
    %350 = vmatprep.mubr.bf16.mxu0 0
    %351 = vmatmul.mubr.bf16.gmra.mrb[0].mxu0 %v168
    %v352 = vpop.f32.mrb[0].mxu0
    %v353 = vadd.f32 0.0, %v352
    %v354 = vpop.f32.mrb[0].mxu0
    %v355 = vadd.f32 0.0, %v354
    %v356 = vpop.f32.mrb[0].mxu0
    %v357 = vadd.f32 0.0, %v356
    %v358 = vpop.f32.mrb[0].mxu0
    %v359 = vadd.f32 0.0, %v358
    %360 = vmatprep.mubr.bf16.mxu0 0
    %361 = vmatmul.mubr.bf16.gmra.mrb[0].mxu0 %v169
    %v362 = vpop.f32.mrb[0].mxu0
    %v363 = vadd.f32 0.0, %v362
    %v364 = vpop.f32.mrb[0].mxu0
    %v365 = vadd.f32 0.0, %v364
    %v366 = vpop.f32.mrb[0].mxu0
    %v367 = vadd.f32 0.0, %v366
    %v368 = vpop.f32.mrb[0].mxu0
    %v369 = vadd.f32 0.0, %v368
    %370 = vdwg.mxu0
    %v371 = vpack.c.bf16 %v297, %v293
    %v372 = vpack.c.bf16 %v299, %v295
    %v373 = vpack.c.bf16 %v307, %v303
    %v374 = vpack.c.bf16 %v309, %v305
    %v375 = vpack.c.bf16 %v317, %v313
    %v376 = vpack.c.bf16 %v319, %v315
    %v377 = vpack.c.bf16 %v327, %v323
    %v378 = vpack.c.bf16 %v329, %v325
    %v379 = vpack.c.bf16 %v337, %v333
    %v380 = vpack.c.bf16 %v339, %v335
    %v381 = vpack.c.bf16 %v347, %v343
    %v382 = vpack.c.bf16 %v349, %v345
    %v383 = vpack.c.bf16 %v357, %v353
    %v384 = vpack.c.bf16 %v359, %v355
    %v385 = vpack.c.bf16 %v367, %v363
    %v386 = vpack.c.bf16 %v369, %v365
    %v403 = vunpack.c.l.b16 %v66
    %v404 = vunpack.c.l.b16 %v67
    %v405 = vunpack.c.l.b16 %v68
    %v406 = vunpack.c.l.b16 %v69
    %v407 = vunpack.c.l.b16 %v70
    %v408 = vunpack.c.l.b16 %v71
    %v409 = vunpack.c.l.b16 %v72
    %v410 = vunpack.c.l.b16 %v73
    %v411 = vunpack.c.l.b16 %v74
    %v412 = vunpack.c.l.b16 %v75
    %v413 = vunpack.c.l.b16 %v76
    %v414 = vunpack.c.l.b16 %v77
    %v415 = vunpack.c.l.b16 %v78
    %v416 = vunpack.c.l.b16 %v79
    %v417 = vunpack.c.l.b16 %v80
    %v418 = vunpack.c.l.b16 %v81
    %v419 = vpack.c.b16 %v404, %v403
    %v420 = vpack.c.b16 %v406, %v405
    %v421 = vpack.c.b16 %v408, %v407
    %v422 = vpack.c.b16 %v410, %v409
    %v423 = vpack.c.b16 %v412, %v411
    %v424 = vpack.c.b16 %v414, %v413
    %v425 = vpack.c.b16 %v416, %v415
    %v426 = vpack.c.b16 %v418, %v417
    %435 = vxpose.xlu0.c.b16.start [1/8] %v419, 128
    %436 = vxpose.xlu0.c.b16.cont [2/8] %v420, 128
    %437 = vxpose.xlu0.c.b16.cont [3/8] %v421, 128
    %438 = vxpose.xlu0.c.b16.cont [4/8] %v422, 128
    %439 = vxpose.xlu0.c.b16.cont [5/8] %v423, 128
    %440 = vxpose.xlu0.c.b16.cont [6/8] %v424, 128
    %441 = vxpose.xlu0.c.b16.cont [7/8] %v425, 128
    %442 = vxpose.xlu0.c.b16.end [8/8] %v426, 128
    %v443 = vpop.trf.xlu0
    %v444 = vpop.trf.xlu0
    %v445 = vpop.trf.xlu0
    %v446 = vpop.trf.xlu0
    %v447 = vpop.trf.xlu0
    %v448 = vpop.trf.xlu0
    %v449 = vpop.trf.xlu0
    %v450 = vpop.trf.xlu0
    %451 = vmatprep.subr.bf16.mxu0 %v372
    %452 = vmatpush1.bf16.msra.mxu0 %v371
    %453 = vmatprep.subr.bf16.mxu0 %v374
    %454 = vmatpush1.bf16.msra.mxu0 %v373
    %455 = vmatprep.subr.bf16.mxu0 %v376
    %456 = vmatpush1.bf16.msra.mxu0 %v375
    %457 = vmatprep.subr.bf16.mxu0 %v378
    %458 = vmatpush1.bf16.msra.mxu0 %v377
    %459 = vmatprep.subr.bf16.mxu0 %v380
    %460 = vmatpush1.bf16.msra.mxu0 %v379
    %461 = vmatprep.subr.bf16.mxu0 %v382
    %462 = vmatpush1.bf16.msra.mxu0 %v381
    %463 = vmatprep.subr.bf16.mxu0 %v384
    %464 = vmatpush1.bf16.msra.mxu0 %v383
    %465 = vmatprep.subr.bf16.mxu0 %v386
    %466 = vmatpush1.bf16.msra.mxu0 %v385
    %467 = vmatprep.subr.bf16.mxu0 0
    %468 = vmatpush1.bf16.msra.mxu0 0
    %469 = vmatprep.subr.bf16.mxu0 0
    %470 = vmatpush1.bf16.msra.mxu0 0
    %471 = vmatprep.subr.bf16.mxu0 0
    %472 = vmatpush1.bf16.msra.mxu0 0
    %473 = vmatprep.subr.bf16.mxu0 0
    %474 = vmatpush1.bf16.msra.mxu0 0
    %475 = vmatprep.subr.bf16.mxu0 0
    %476 = vmatpush1.bf16.msra.mxu0 0
    %477 = vmatprep.subr.bf16.mxu0 0
    %478 = vmatpush1.bf16.msra.mxu0 0
    %479 = vmatprep.subr.bf16.mxu0 0
    %480 = vmatpush1.bf16.msra.mxu0 0
    %481 = vmatprep.subr.bf16.mxu0 0
    %482 = vmatpush1.bf16.msra.mxu0 0
    %483 = vmatprep.mubr.bf16.mxu0 0
    %484 = vmatmul.mubr.bf16.gmra.mrb[0].mxu0 %v443
    %v485 = vpop.f32.mrb[0].mxu0
    %v486 = vadd.f32 %v293, %v485
    %v487 = vpop.f32.mrb[0].mxu0
    %v488 = vadd.f32 %v295, %v487
    %v489 = vpop.f32.mrb[0].mxu0
    %v490 = vadd.f32 %v297, %v489
    %v491 = vpop.f32.mrb[0].mxu0
    %v492 = vadd.f32 %v299, %v491
    %493 = vmatprep.mubr.bf16.mxu0 0
    %494 = vmatmul.mubr.bf16.gmra.mrb[0].mxu0 %v444
    %v495 = vpop.f32.mrb[0].mxu0
    %v496 = vadd.f32 %v303, %v495
    %v497 = vpop.f32.mrb[0].mxu0
    %v498 = vadd.f32 %v305, %v497
    %v499 = vpop.f32.mrb[0].mxu0
    %v500 = vadd.f32 %v307, %v499
    %v501 = vpop.f32.mrb[0].mxu0
    %v502 = vadd.f32 %v309, %v501
    %503 = vmatprep.mubr.bf16.mxu0 0
    %504 = vmatmul.mubr.bf16.gmra.mrb[0].mxu0 %v445
    %v505 = vpop.f32.mrb[0].mxu0
    %v506 = vadd.f32 %v313, %v505
    %v507 = vpop.f32.mrb[0].mxu0
    %v508 = vadd.f32 %v315, %v507
    %v509 = vpop.f32.mrb[0].mxu0
    %v510 = vadd.f32 %v317, %v509
    %v511 = vpop.f32.mrb[0].mxu0
    %v512 = vadd.f32 %v319, %v511
    %513 = vmatprep.mubr.bf16.mxu0 0
    %514 = vmatmul.mubr.bf16.gmra.mrb[0].mxu0 %v446
    %v515 = vpop.f32.mrb[0].mxu0
    %v516 = vadd.f32 %v323, %v515
    %v517 = vpop.f32.mrb[0].mxu0
    %v518 = vadd.f32 %v325, %v517
    %v519 = vpop.f32.mrb[0].mxu0
    %v520 = vadd.f32 %v327, %v519
    %v521 = vpop.f32.mrb[0].mxu0
    %v522 = vadd.f32 %v329, %v521
    %523 = vmatprep.mubr.bf16.mxu0 0
    %524 = vmatmul.mubr.bf16.gmra.mrb[0].mxu0 %v447
    %v525 = vpop.f32.mrb[0].mxu0
    %v526 = vadd.f32 %v333, %v525
    %v527 = vpop.f32.mrb[0].mxu0
    %v528 = vadd.f32 %v335, %v527
    %v529 = vpop.f32.mrb[0].mxu0
    %v530 = vadd.f32 %v337, %v529
    %v531 = vpop.f32.mrb[0].mxu0
    %v532 = vadd.f32 %v339, %v531
    %533 = vmatprep.mubr.bf16.mxu0 0
    %534 = vmatmul.mubr.bf16.gmra.mrb[0].mxu0 %v448
    %v535 = vpop.f32.mrb[0].mxu0
    %v536 = vadd.f32 %v343, %v535
    %v537 = vpop.f32.mrb[0].mxu0
    %v538 = vadd.f32 %v345, %v537
    %v539 = vpop.f32.mrb[0].mxu0
    %v540 = vadd.f32 %v347, %v539
    %v541 = vpop.f32.mrb[0].mxu0
    %v542 = vadd.f32 %v349, %v541
    %543 = vmatprep.mubr.bf16.mxu0 0
    %544 = vmatmul.mubr.bf16.gmra.mrb[0].mxu0 %v449
    %v545 = vpop.f32.mrb[0].mxu0
    %v546 = vadd.f32 %v353, %v545
    %v547 = vpop.f32.mrb[0].mxu0
    %v548 = vadd.f32 %v355, %v547
    %v549 = vpop.f32.mrb[0].mxu0
    %v550 = vadd.f32 %v357, %v549
    %v551 = vpop.f32.mrb[0].mxu0
    %v552 = vadd.f32 %v359, %v551
    %553 = vmatprep.mubr.bf16.mxu0 0
    %554 = vmatmul.mubr.bf16.gmra.mrb[0].mxu0 %v450
    %v555 = vpop.f32.mrb[0].mxu0
    %v556 = vadd.f32 %v363, %v555
    %v557 = vpop.f32.mrb[0].mxu0
    %v558 = vadd.f32 %v365, %v557
    %v559 = vpop.f32.mrb[0].mxu0
    %v560 = vadd.f32 %v367, %v559
    %v561 = vpop.f32.mrb[0].mxu0
    %v562 = vadd.f32 %v369, %v561
    %563 = vdwg.mxu0
    %565 = vset.pattern.permute.xlu0 0
    %566 = vperm.xlu0 %565, %v82
    %v567 = vpop.permute.xlu0 %566
    %570 = vset.pattern.permute.xlu0 0
    %571 = vperm.xlu0 %570, %v83
    %v572 = vpop.permute.xlu0 %571
    %575 = vset.pattern.permute.xlu0 0
    %576 = vperm.xlu0 %575, %v84
    %v577 = vpop.permute.xlu0 %576
    %580 = vset.pattern.permute.xlu0 0
    %581 = vperm.xlu0 %580, %v85
    %v582 = vpop.permute.xlu0 %581
    %585 = vset.pattern.permute.xlu0 0
    %586 = vperm.xlu0 %585, %v86
    %v587 = vpop.permute.xlu0 %586
    %590 = vset.pattern.permute.xlu0 0
    %591 = vperm.xlu0 %590, %v87
    %v592 = vpop.permute.xlu0 %591
    %595 = vset.pattern.permute.xlu0 0
    %596 = vperm.xlu0 %595, %v88
    %v597 = vpop.permute.xlu0 %596
    %600 = vset.pattern.permute.xlu0 0
    %601 = vperm.xlu0 %600, %v89
    %v602 = vpop.permute.xlu0 %601
    %605 = vset.pattern.permute.xlu0 0
    %606 = vperm.xlu0 %605, %v90
    %v607 = vpop.permute.xlu0 %606
    %610 = vset.pattern.permute.xlu0 0
    %611 = vperm.xlu0 %610, %v91
    %v612 = vpop.permute.xlu0 %611
    %615 = vset.pattern.permute.xlu0 0
    %616 = vperm.xlu0 %615, %v92
    %v617 = vpop.permute.xlu0 %616
    %620 = vset.pattern.permute.xlu0 0
    %621 = vperm.xlu0 %620, %v93
    %v622 = vpop.permute.xlu0 %621
    %625 = vset.pattern.permute.xlu0 0
    %626 = vperm.xlu0 %625, %v94
    %v627 = vpop.permute.xlu0 %626
    %630 = vset.pattern.permute.xlu0 0
    %631 = vperm.xlu0 %630, %v95
    %v632 = vpop.permute.xlu0 %631
    %635 = vset.pattern.permute.xlu0 0
    %636 = vperm.xlu0 %635, %v96
    %v637 = vpop.permute.xlu0 %636
    %640 = vset.pattern.permute.xlu0 0
    %641 = vperm.xlu0 %640, %v97
    %v642 = vpop.permute.xlu0 %641
    %v644 = vmul.f32 %v486, %v567
    %v645 = vmul.f32 %v488, %v567
    %v646 = vmul.f32 %v490, %v572
    %v647 = vmul.f32 %v492, %v572
    %v648 = vmul.f32 %v496, %v577
    %v649 = vmul.f32 %v498, %v577
    %v650 = vmul.f32 %v500, %v582
    %v651 = vmul.f32 %v502, %v582
    %v652 = vmul.f32 %v506, %v587
    %v653 = vmul.f32 %v508, %v587
    %v654 = vmul.f32 %v510, %v592
    %v655 = vmul.f32 %v512, %v592
    %v656 = vmul.f32 %v516, %v597
    %v657 = vmul.f32 %v518, %v597
    %v658 = vmul.f32 %v520, %v602
    %v659 = vmul.f32 %v522, %v602
    %v660 = vmul.f32 %v526, %v607
    %v661 = vmul.f32 %v528, %v607
    %v662 = vmul.f32 %v530, %v612
    %v663 = vmul.f32 %v532, %v612
    %v664 = vmul.f32 %v536, %v617
    %v665 = vmul.f32 %v538, %v617
    %v666 = vmul.f32 %v540, %v622
    %v667 = vmul.f32 %v542, %v622
    %v668 = vmul.f32 %v546, %v627
    %v669 = vmul.f32 %v548, %v627
    %v670 = vmul.f32 %v550, %v632
    %v671 = vmul.f32 %v552, %v632
    %v672 = vmul.f32 %v556, %v637
    %v673 = vmul.f32 %v558, %v637
    %v674 = vmul.f32 %v560, %v642
    %v675 = vmul.f32 %v562, %v642
    %v676 = vmax.f32 %v644, 0.0
    %v677 = vmax.f32 %v645, 0.0
    %v678 = vmax.f32 %v646, 0.0
    %v679 = vmax.f32 %v647, 0.0
    %v680 = vmax.f32 %v648, 0.0
    %v681 = vmax.f32 %v649, 0.0
    %v682 = vmax.f32 %v650, 0.0
    %v683 = vmax.f32 %v651, 0.0
    %v684 = vmax.f32 %v652, 0.0
    %v685 = vmax.f32 %v653, 0.0
    %v686 = vmax.f32 %v654, 0.0
    %v687 = vmax.f32 %v655, 0.0
    %v688 = vmax.f32 %v656, 0.0
    %v689 = vmax.f32 %v657, 0.0
    %v690 = vmax.f32 %v658, 0.0
    %v691 = vmax.f32 %v659, 0.0
    %v692 = vmax.f32 %v660, 0.0
    %v693 = vmax.f32 %v661, 0.0
    %v694 = vmax.f32 %v662, 0.0
    %v695 = vmax.f32 %v663, 0.0
    %v696 = vmax.f32 %v664, 0.0
    %v697 = vmax.f32 %v665, 0.0
    %v698 = vmax.f32 %v666, 0.0
    %v699 = vmax.f32 %v667, 0.0
    %v700 = vmax.f32 %v668, 0.0
    %v701 = vmax.f32 %v669, 0.0
    %v702 = vmax.f32 %v670, 0.0
    %v703 = vmax.f32 %v671, 0.0
    %v704 = vmax.f32 %v672, 0.0
    %v705 = vmax.f32 %v673, 0.0
    %v706 = vmax.f32 %v674, 0.0
    %v707 = vmax.f32 %v675, 0.0
    %708 = vst [vmem:[#allocation9] sm:$0xff] %v676
    %709 = vst [vmem:[#allocation9 + $0x8] sm:$0xff] %v677
    %710 = vst [vmem:[#allocation9 + $0x10] sm:$0xff] %v678
    %711 = vst [vmem:[#allocation9 + $0x18] sm:$0xff] %v679
    %712 = vst [vmem:[#allocation9 + $0x20] sm:$0xff] %v680
    %713 = vst [vmem:[#allocation9 + $0x28] sm:$0xff] %v681
    %714 = vst [vmem:[#allocation9 + $0x30] sm:$0xff] %v682
    %715 = vst [vmem:[#allocation9 + $0x38] sm:$0xff] %v683
    %716 = vst [vmem:[#allocation9 + $0x40] sm:$0xff] %v684
    %717 = vst [vmem:[#allocation9 + $0x48] sm:$0xff] %v685
    %718 = vst [vmem:[#allocation9 + $0x50] sm:$0xff] %v686
    %719 = vst [vmem:[#allocation9 + $0x58] sm:$0xff] %v687
    %720 = vst [vmem:[#allocation9 + $0x60] sm:$0xff] %v688
    %721 = vst [vmem:[#allocation9 + $0x68] sm:$0xff] %v689
    %722 = vst [vmem:[#allocation9 + $0x70] sm:$0xff] %v690
    %723 = vst [vmem:[#allocation9 + $0x78] sm:$0xff] %v691
    %724 = vst [vmem:[#allocation9 + $0x80] sm:$0xff] %v692
    %725 = vst [vmem:[#allocation9 + $0x88] sm:$0xff] %v693
    %726 = vst [vmem:[#allocation9 + $0x90] sm:$0xff] %v694
    %727 = vst [vmem:[#allocation9 + $0x98] sm:$0xff] %v695
    %728 = vst [vmem:[#allocation9 + $0xa0] sm:$0xff] %v696
    %729 = vst [vmem:[#allocation9 + $0xa8] sm:$0xff] %v697
    %730 = vst [vmem:[#allocation9 + $0xb0] sm:$0xff] %v698
    %731 = vst [vmem:[#allocation9 + $0xb8] sm:$0xff] %v699
    %732 = vst [vmem:[#allocation9 + $0xc0] sm:$0xff] %v700
    %733 = vst [vmem:[#allocation9 + $0xc8] sm:$0xff] %v701
    %734 = vst [vmem:[#allocation9 + $0xd0] sm:$0xff] %v702
    %735 = vst [vmem:[#allocation9 + $0xd8] sm:$0xff] %v703
    %736 = vst [vmem:[#allocation9 + $0xe0] sm:$0xff] %v704
    %737 = vst [vmem:[#allocation9 + $0xe8] sm:$0xff] %v705
    %738 = vst [vmem:[#allocation9 + $0xf0] sm:$0xff] %v706
    %739 = vst [vmem:[#allocation9 + $0xf8] sm:$0xff] %v707
    %v740 = vpack.c.bf16 %v678, %v676
    %v741 = vpack.c.bf16 %v679, %v677
    %v742 = vpack.c.bf16 %v682, %v680
    %v743 = vpack.c.bf16 %v683, %v681
    %v744 = vpack.c.bf16 %v686, %v684
    %v745 = vpack.c.bf16 %v687, %v685
    %v746 = vpack.c.bf16 %v690, %v688
    %v747 = vpack.c.bf16 %v691, %v689
    %v748 = vpack.c.bf16 %v694, %v692
    %v749 = vpack.c.bf16 %v695, %v693
    %v750 = vpack.c.bf16 %v698, %v696
    %v751 = vpack.c.bf16 %v699, %v697
    %v752 = vpack.c.bf16 %v702, %v700
    %v753 = vpack.c.bf16 %v703, %v701
    %v754 = vpack.c.bf16 %v706, %v704
    %v755 = vpack.c.bf16 %v707, %v705
    %v756 = vld [vmem:[#allocation7] sm:$0xf]
    %v757 = vld [vmem:[#allocation7 + $0x4] sm:$0xf]
    %v758 = vld [vmem:[#allocation7 + $0x8] sm:$0xf]
    %v759 = vld [vmem:[#allocation7 + $0xc] sm:$0xf]
    %v760 = vld [vmem:[#allocation7 + $0x10] sm:$0xf]
    %v761 = vld [vmem:[#allocation7 + $0x14] sm:$0xf]
    %v762 = vld [vmem:[#allocation7 + $0x18] sm:$0xf]
    %v763 = vld [vmem:[#allocation7 + $0x1c] sm:$0xf]
    %v764 = vld [vmem:[#allocation7 + $0x20] sm:$0xf]
    %v765 = vld [vmem:[#allocation7 + $0x24] sm:$0xf]
    %v766 = vld [vmem:[#allocation7 + $0x28] sm:$0xf]
    %v767 = vld [vmem:[#allocation7 + $0x2c] sm:$0xf]
    %v768 = vld [vmem:[#allocation7 + $0x30] sm:$0xf]
    %v769 = vld [vmem:[#allocation7 + $0x34] sm:$0xf]
    %v770 = vld [vmem:[#allocation7 + $0x38] sm:$0xf]
    %v771 = vld [vmem:[#allocation7 + $0x3c] sm:$0xf]
    %v772 = vld [vmem:[#allocation7 + $0x40] sm:$0xf]
    %v773 = vld [vmem:[#allocation7 + $0x44] sm:$0xf]
    %v774 = vld [vmem:[#allocation7 + $0x48] sm:$0xf]
    %v775 = vld [vmem:[#allocation7 + $0x4c] sm:$0xf]
    %v776 = vld [vmem:[#allocation7 + $0x50] sm:$0xf]
    %v777 = vld [vmem:[#allocation7 + $0x54] sm:$0xf]
    %v778 = vld [vmem:[#allocation7 + $0x58] sm:$0xf]
    %v779 = vld [vmem:[#allocation7 + $0x5c] sm:$0xf]
    %v780 = vld [vmem:[#allocation7 + $0x60] sm:$0xf]
    %v781 = vld [vmem:[#allocation7 + $0x64] sm:$0xf]
    %v782 = vld [vmem:[#allocation7 + $0x68] sm:$0xf]
    %v783 = vld [vmem:[#allocation7 + $0x6c] sm:$0xf]
    %v784 = vld [vmem:[#allocation7 + $0x70] sm:$0xf]
    %v785 = vld [vmem:[#allocation7 + $0x74] sm:$0xf]
    %v786 = vld [vmem:[#allocation7 + $0x78] sm:$0xf]
    %v787 = vld [vmem:[#allocation7 + $0x7c] sm:$0xf]
    %v820 = vunpack.c.l.b16 %v756
    %v821 = vunpack.c.l.b16 %v757
    %v822 = vunpack.c.l.b16 %v758
    %v823 = vunpack.c.l.b16 %v759
    %v824 = vunpack.c.l.b16 %v760
    %v825 = vunpack.c.l.b16 %v761
    %v826 = vunpack.c.l.b16 %v762
    %v827 = vunpack.c.l.b16 %v763
    %v828 = vunpack.c.l.b16 %v764
    %v829 = vunpack.c.l.b16 %v765
    %v830 = vunpack.c.l.b16 %v766
    %v831 = vunpack.c.l.b16 %v767
    %v832 = vunpack.c.l.b16 %v768
    %v833 = vunpack.c.l.b16 %v769
    %v834 = vunpack.c.l.b16 %v770
    %v835 = vunpack.c.l.b16 %v771
    %v836 = vunpack.c.l.b16 %v772
    %v837 = vunpack.c.l.b16 %v773
    %v838 = vunpack.c.l.b16 %v774
    %v839 = vunpack.c.l.b16 %v775
    %v840 = vunpack.c.l.b16 %v776
    %v841 = vunpack.c.l.b16 %v777
    %v842 = vunpack.c.l.b16 %v778
    %v843 = vunpack.c.l.b16 %v779
    %v844 = vunpack.c.l.b16 %v780
    %v845 = vunpack.c.l.b16 %v781
    %v846 = vunpack.c.l.b16 %v782
    %v847 = vunpack.c.l.b16 %v783
    %v848 = vunpack.c.l.b16 %v784
    %v849 = vunpack.c.l.b16 %v785
    %v850 = vunpack.c.l.b16 %v786
    %v851 = vunpack.c.l.b16 %v787
    %v852 = vpack.c.b16 %v821, %v820
    %v853 = vpack.c.b16 %v823, %v822
    %v854 = vpack.c.b16 %v825, %v824
    %v855 = vpack.c.b16 %v827, %v826
    %v856 = vpack.c.b16 %v829, %v828
    %v857 = vpack.c.b16 %v831, %v830
    %v858 = vpack.c.b16 %v833, %v832
    %v859 = vpack.c.b16 %v835, %v834
    %v860 = vpack.c.b16 %v837, %v836
    %v861 = vpack.c.b16 %v839, %v838
    %v862 = vpack.c.b16 %v841, %v840
    %v863 = vpack.c.b16 %v843, %v842
    %v864 = vpack.c.b16 %v845, %v844
    %v865 = vpack.c.b16 %v847, %v846
    %v866 = vpack.c.b16 %v849, %v848
    %v867 = vpack.c.b16 %v851, %v850
    %884 = vmatprep.subr.bf16.mxu0 0
    %885 = vmatpush1.bf16.msra.mxu0 %v852
    %886 = vmatprep.subr.bf16.mxu0 0
    %887 = vmatpush1.bf16.msra.mxu0 %v853
    %888 = vmatprep.subr.bf16.mxu0 0
    %889 = vmatpush1.bf16.msra.mxu0 %v854
    %890 = vmatprep.subr.bf16.mxu0 0
    %891 = vmatpush1.bf16.msra.mxu0 %v855
    %892 = vmatprep.subr.bf16.mxu0 0
    %893 = vmatpush1.bf16.msra.mxu0 %v856
    %894 = vmatprep.subr.bf16.mxu0 0
    %895 = vmatpush1.bf16.msra.mxu0 %v857
    %896 = vmatprep.subr.bf16.mxu0 0
    %897 = vmatpush1.bf16.msra.mxu0 %v858
    %898 = vmatprep.subr.bf16.mxu0 0
    %899 = vmatpush1.bf16.msra.mxu0 %v859
    %900 = vmatprep.subr.bf16.mxu0 0
    %901 = vmatpush1.bf16.msra.mxu0 %v860
    %902 = vmatprep.subr.bf16.mxu0 0
    %903 = vmatpush1.bf16.msra.mxu0 %v861
    %904 = vmatprep.subr.bf16.mxu0 0
    %905 = vmatpush1.bf16.msra.mxu0 %v862
    %906 = vmatprep.subr.bf16.mxu0 0
    %907 = vmatpush1.bf16.msra.mxu0 %v863
    %908 = vmatprep.subr.bf16.mxu0 0
    %909 = vmatpush1.bf16.msra.mxu0 %v864
    %910 = vmatprep.subr.bf16.mxu0 0
    %911 = vmatpush1.bf16.msra.mxu0 %v865
    %912 = vmatprep.subr.bf16.mxu0 0
    %913 = vmatpush1.bf16.msra.mxu0 %v866
    %914 = vmatprep.subr.bf16.mxu0 0
    %915 = vmatpush1.bf16.msra.mxu0 %v867
    %916 = vmatprep.mubr.bf16.mxu0 %v741
    %917 = vmatmul.mubr.bf16.gmra.mrb[0].mxu0 %v740
    %v918 = vpop.f32.mrb[0].mxu0
    %v919 = vadd.f32 0.0, %v918
    %v920 = vpop.f32.mrb[0].mxu0
    %v921 = vpop.f32.mrb[0].mxu0
    %v922 = vadd.f32 0.0, %v921
    %v923 = vpop.f32.mrb[0].mxu0
    %924 = vmatprep.mubr.bf16.mxu0 %v743
    %925 = vmatmul.mubr.bf16.gmra.mrb[0].mxu0 %v742
    %v926 = vpop.f32.mrb[0].mxu0
    %v927 = vadd.f32 0.0, %v926
    %v928 = vpop.f32.mrb[0].mxu0
    %v929 = vpop.f32.mrb[0].mxu0
    %v930 = vadd.f32 0.0, %v929
    %v931 = vpop.f32.mrb[0].mxu0
    %932 = vmatprep.mubr.bf16.mxu0 %v745
    %933 = vmatmul.mubr.bf16.gmra.mrb[0].mxu0 %v744
    %v934 = vpop.f32.mrb[0].mxu0
    %v935 = vadd.f32 0.0, %v934
    %v936 = vpop.f32.mrb[0].mxu0
    %v937 = vpop.f32.mrb[0].mxu0
    %v938 = vadd.f32 0.0, %v937
    %v939 = vpop.f32.mrb[0].mxu0
    %940 = vmatprep.mubr.bf16.mxu0 %v747
    %941 = vmatmul.mubr.bf16.gmra.mrb[0].mxu0 %v746
    %v942 = vpop.f32.mrb[0].mxu0
    %v943 = vadd.f32 0.0, %v942
    %v944 = vpop.f32.mrb[0].mxu0
    %v945 = vpop.f32.mrb[0].mxu0
    %v946 = vadd.f32 0.0, %v945
    %v947 = vpop.f32.mrb[0].mxu0
    %948 = vmatprep.mubr.bf16.mxu0 %v749
    %949 = vmatmul.mubr.bf16.gmra.mrb[0].mxu0 %v748
    %v950 = vpop.f32.mrb[0].mxu0
    %v951 = vadd.f32 0.0, %v950
    %v952 = vpop.f32.mrb[0].mxu0
    %v953 = vpop.f32.mrb[0].mxu0
    %v954 = vadd.f32 0.0, %v953
    %v955 = vpop.f32.mrb[0].mxu0
    %956 = vmatprep.mubr.bf16.mxu0 %v751
    %957 = vmatmul.mubr.bf16.gmra.mrb[0].mxu0 %v750
    %v958 = vpop.f32.mrb[0].mxu0
    %v959 = vadd.f32 0.0, %v958
    %v960 = vpop.f32.mrb[0].mxu0
    %v961 = vpop.f32.mrb[0].mxu0
    %v962 = vadd.f32 0.0, %v961
    %v963 = vpop.f32.mrb[0].mxu0
    %964 = vmatprep.mubr.bf16.mxu0 %v753
    %965 = vmatmul.mubr.bf16.gmra.mrb[0].mxu0 %v752
    %v966 = vpop.f32.mrb[0].mxu0
    %v967 = vadd.f32 0.0, %v966
    %v968 = vpop.f32.mrb[0].mxu0
    %v969 = vpop.f32.mrb[0].mxu0
    %v970 = vadd.f32 0.0, %v969
    %v971 = vpop.f32.mrb[0].mxu0
    %972 = vmatprep.mubr.bf16.mxu0 %v755
    %973 = vmatmul.mubr.bf16.gmra.mrb[0].mxu0 %v754
    %v974 = vpop.f32.mrb[0].mxu0
    %v975 = vadd.f32 0.0, %v974
    %v976 = vpop.f32.mrb[0].mxu0
    %v977 = vpop.f32.mrb[0].mxu0
    %v978 = vadd.f32 0.0, %v977
    %v979 = vpop.f32.mrb[0].mxu0
    %980 = vdwg.mxu0
    %v981 = vpack.c.bf16 %v922, %v919
    %v982 = vpack.c.bf16 %v930, %v927
    %v983 = vpack.c.bf16 %v938, %v935
    %v984 = vpack.c.bf16 %v946, %v943
    %v985 = vpack.c.bf16 %v954, %v951
    %v986 = vpack.c.bf16 %v962, %v959
    %v987 = vpack.c.bf16 %v970, %v967
    %v988 = vpack.c.bf16 %v978, %v975
    %989 = vmatprep.subr.bf16.mxu0 0
    %990 = vmatpush1.bf16.msra.mxu0 %v981
    %991 = vmatprep.subr.bf16.mxu0 0
    %992 = vmatpush1.bf16.msra.mxu0 %v982
    %993 = vmatprep.subr.bf16.mxu0 0
    %994 = vmatpush1.bf16.msra.mxu0 %v983
    %995 = vmatprep.subr.bf16.mxu0 0
    %996 = vmatpush1.bf16.msra.mxu0 %v984
    %997 = vmatprep.subr.bf16.mxu0 0
    %998 = vmatpush1.bf16.msra.mxu0 %v985
    %999 = vmatprep.subr.bf16.mxu0 0
    %1000 = vmatpush1.bf16.msra.mxu0 %v986
    %1001 = vmatprep.subr.bf16.mxu0 0
    %1002 = vmatpush1.bf16.msra.mxu0 %v987
    %1003 = vmatprep.subr.bf16.mxu0 0
    %1004 = vmatpush1.bf16.msra.mxu0 %v988
    %1005 = vmatprep.subr.bf16.mxu0 0
    %1006 = vmatpush1.bf16.msra.mxu0 0
    %1007 = vmatprep.subr.bf16.mxu0 0
    %1008 = vmatpush1.bf16.msra.mxu0 0
    %1009 = vmatprep.subr.bf16.mxu0 0
    %1010 = vmatpush1.bf16.msra.mxu0 0
    %1011 = vmatprep.subr.bf16.mxu0 0
    %1012 = vmatpush1.bf16.msra.mxu0 0
    %1013 = vmatprep.subr.bf16.mxu0 0
    %1014 = vmatpush1.bf16.msra.mxu0 0
    %1015 = vmatprep.subr.bf16.mxu0 0
    %1016 = vmatpush1.bf16.msra.mxu0 0
    %1017 = vmatprep.subr.bf16.mxu0 0
    %1018 = vmatpush1.bf16.msra.mxu0 0
    %1019 = vmatprep.subr.bf16.mxu0 0
    %1020 = vmatpush1.bf16.msra.mxu0 0
    %1021 = vmatprep.mubr.bf16.mxu0 0
    %1022 = vmatmul.mubr.bf16.gmra.mrb[0].mxu0 %v443
    %v1023 = vpop.f32.mrb[0].mxu0
    %v1024 = vadd.f32 %v919, %v1023
    %v1025 = vpop.f32.mrb[0].mxu0
    %v1026 = vpop.f32.mrb[0].mxu0
    %v1027 = vadd.f32 %v922, %v1026
    %v1028 = vpop.f32.mrb[0].mxu0
    %1029 = vmatprep.mubr.bf16.mxu0 0
    %1030 = vmatmul.mubr.bf16.gmra.mrb[0].mxu0 %v444
    %v1031 = vpop.f32.mrb[0].mxu0
    %v1032 = vadd.f32 %v927, %v1031
    %v1033 = vpop.f32.mrb[0].mxu0
    %v1034 = vpop.f32.mrb[0].mxu0
    %v1035 = vadd.f32 %v930, %v1034
    %v1036 = vpop.f32.mrb[0].mxu0
    %1037 = vmatprep.mubr.bf16.mxu0 0
    %1038 = vmatmul.mubr.bf16.gmra.mrb[0].mxu0 %v445
    %v1039 = vpop.f32.mrb[0].mxu0
    %v1040 = vadd.f32 %v935, %v1039
    %v1041 = vpop.f32.mrb[0].mxu0
    %v1042 = vpop.f32.mrb[0].mxu0
    %v1043 = vadd.f32 %v938, %v1042
    %v1044 = vpop.f32.mrb[0].mxu0
    %1045 = vmatprep.mubr.bf16.mxu0 0
    %1046 = vmatmul.mubr.bf16.gmra.mrb[0].mxu0 %v446
    %v1047 = vpop.f32.mrb[0].mxu0
    %v1048 = vadd.f32 %v943, %v1047
    %v1049 = vpop.f32.mrb[0].mxu0
    %v1050 = vpop.f32.mrb[0].mxu0
    %v1051 = vadd.f32 %v946, %v1050
    %v1052 = vpop.f32.mrb[0].mxu0
    %1053 = vmatprep.mubr.bf16.mxu0 0
    %1054 = vmatmul.mubr.bf16.gmra.mrb[0].mxu0 %v447
    %v1055 = vpop.f32.mrb[0].mxu0
    %v1056 = vadd.f32 %v951, %v1055
    %v1057 = vpop.f32.mrb[0].mxu0
    %v1058 = vpop.f32.mrb[0].mxu0
    %v1059 = vadd.f32 %v954, %v1058
    %v1060 = vpop.f32.mrb[0].mxu0
    %1061 = vmatprep.mubr.bf16.mxu0 0
    %1062 = vmatmul.mubr.bf16.gmra.mrb[0].mxu0 %v448
    %v1063 = vpop.f32.mrb[0].mxu0
    %v1064 = vadd.f32 %v959, %v1063
    %v1065 = vpop.f32.mrb[0].mxu0
    %v1066 = vpop.f32.mrb[0].mxu0
    %v1067 = vadd.f32 %v962, %v1066
    %v1068 = vpop.f32.mrb[0].mxu0
    %1069 = vmatprep.mubr.bf16.mxu0 0
    %1070 = vmatmul.mubr.bf16.gmra.mrb[0].mxu0 %v449
    %v1071 = vpop.f32.mrb[0].mxu0
    %v1072 = vadd.f32 %v967, %v1071
    %v1073 = vpop.f32.mrb[0].mxu0
    %v1074 = vpop.f32.mrb[0].mxu0
    %v1075 = vadd.f32 %v970, %v1074
    %v1076 = vpop.f32.mrb[0].mxu0
    %1077 = vmatprep.mubr.bf16.mxu0 0
    %1078 = vmatmul.mubr.bf16.gmra.mrb[0].mxu0 %v450
    %v1079 = vpop.f32.mrb[0].mxu0
    %v1080 = vadd.f32 %v975, %v1079
    %v1081 = vpop.f32.mrb[0].mxu0
    %v1082 = vpop.f32.mrb[0].mxu0
    %v1083 = vadd.f32 %v978, %v1082
    %v1084 = vpop.f32.mrb[0].mxu0
    %1085 = vdwg.mxu0
    %v1086 = vmul.f32 %v1024, %v567
    %v1087 = vmul.f32 %v1027, %v572
    %v1088 = vmul.f32 %v1032, %v577
    %v1089 = vmul.f32 %v1035, %v582
    %v1090 = vmul.f32 %v1040, %v587
    %v1091 = vmul.f32 %v1043, %v592
    %v1092 = vmul.f32 %v1048, %v597
    %v1093 = vmul.f32 %v1051, %v602
    %v1094 = vmul.f32 %v1056, %v607
    %v1095 = vmul.f32 %v1059, %v612
    %v1096 = vmul.f32 %v1064, %v617
    %v1097 = vmul.f32 %v1067, %v622
    %v1098 = vmul.f32 %v1072, %v627
    %v1099 = vmul.f32 %v1075, %v632
    %v1100 = vmul.f32 %v1080, %v637
    %v1101 = vmul.f32 %v1083, %v642
    %v1102 = vmax.f32 %v1086, 0.0
    %v1103 = vmax.f32 %v1087, 0.0
    %v1104 = vmax.f32 %v1088, 0.0
    %v1105 = vmax.f32 %v1089, 0.0
    %v1106 = vmax.f32 %v1090, 0.0
    %v1107 = vmax.f32 %v1091, 0.0
    %v1108 = vmax.f32 %v1092, 0.0
    %v1109 = vmax.f32 %v1093, 0.0
    %v1110 = vmax.f32 %v1094, 0.0
    %v1111 = vmax.f32 %v1095, 0.0
    %v1112 = vmax.f32 %v1096, 0.0
    %v1113 = vmax.f32 %v1097, 0.0
    %v1114 = vmax.f32 %v1098, 0.0
    %v1115 = vmax.f32 %v1099, 0.0
    %v1116 = vmax.f32 %v1100, 0.0
    %v1117 = vmax.f32 %v1101, 0.0
    %1118 = vst [vmem:[#allocation8] sm:$0xff] %v1102
    %1119 = vst [vmem:[#allocation8 + $0x8] sm:$0xff] %v1103
    %1120 = vst [vmem:[#allocation8 + $0x10] sm:$0xff] %v1104
    %1121 = vst [vmem:[#allocation8 + $0x18] sm:$0xff] %v1105
    %1122 = vst [vmem:[#allocation8 + $0x20] sm:$0xff] %v1106
    %1123 = vst [vmem:[#allocation8 + $0x28] sm:$0xff] %v1107
    %1124 = vst [vmem:[#allocation8 + $0x30] sm:$0xff] %v1108
    %1125 = vst [vmem:[#allocation8 + $0x38] sm:$0xff] %v1109
    %1126 = vst [vmem:[#allocation8 + $0x40] sm:$0xff] %v1110
    %1127 = vst [vmem:[#allocation8 + $0x48] sm:$0xff] %v1111
    %1128 = vst [vmem:[#allocation8 + $0x50] sm:$0xff] %v1112
    %1129 = vst [vmem:[#allocation8 + $0x58] sm:$0xff] %v1113
    %1130 = vst [vmem:[#allocation8 + $0x60] sm:$0xff] %v1114
    %1131 = vst [vmem:[#allocation8 + $0x68] sm:$0xff] %v1115
    %1132 = vst [vmem:[#allocation8 + $0x70] sm:$0xff] %v1116
    %1133 = vst [vmem:[#allocation8 + $0x78] sm:$0xff] %v1117
    // Predicated region
    $region34: #{tpu_custom_call.1} parent=1 // pred_check
      _
    $region35: #{tpu_custom_call.1} parent=1 // pred_check_branch
      %1135 = sbr.rel (0) target = $region37
    $region36: #{tpu_custom_call.1} parent=1 // pred_region
      %s1137 = ssub.s32 2048, 2048
      %1138 = vsyncadd [#allocation4], %s1137
      %s1139 = sshll.u32 [#allocation8], 4
      %s1140 = int_to_ptr.vmem [resolvable:$true] %s1139
      %1145 = dma.vmem_to_hbm [thread:$0]  %s1140, 2048, %s5, [#allocation4], 128, 128, 8
    $region37: #{tpu_custom_call.1} parent=1 // pred_fallthru
      _
    // Predicated region
    $region38: #{tpu_custom_call.1} parent=1 // pred_check
      _
    $region39: #{tpu_custom_call.1} parent=1 // pred_check_branch
      %1147 = sbr.rel (0) target = $region41
    $region40: #{tpu_custom_call.1} parent=1 // pred_region
      %s1149 = ssub.s32 4096, 4096
      %1150 = vsyncadd [#allocation10], %s1149
      %s1151 = sshll.u32 [#allocation9], 4
      %s1152 = int_to_ptr.vmem [resolvable:$true] %s1151
      %1157 = dma.vmem_to_hbm [thread:$0]  %s1152, 4096, %s6, [#allocation10], 256, 256, 16
    $region41: #{tpu_custom_call.1} parent=1 // pred_fallthru
      _
    // Predicated region
    $region42: #{tpu_custom_call.1} parent=1 // pred_check
      _
    $region43: #{tpu_custom_call.1} parent=1 // pred_check_branch
      %1159 = sbr.rel (0) target = $region45
    $region44: #{tpu_custom_call.1} parent=1 // pred_region
      %1160 = dma.done [#allocation4], 2048
    $region45: #{tpu_custom_call.1} parent=1 // pred_fallthru
      _
    // Predicated region
    $region46: #{tpu_custom_call.1} parent=1 // pred_check
      _
    $region47: #{tpu_custom_call.1} parent=1 // pred_check_branch
      %1162 = sbr.rel (0) target = $region49
    $region48: #{tpu_custom_call.1} parent=1 // pred_region
      %1163 = dma.done [#allocation10], 4096
    $region49: #{tpu_custom_call.1} parent=1 // pred_fallthru
      _
    %1164 = vsyncpa [#allocation3], 1
    %1165 = vsyncpa [#allocation6], 1
    %1166 = vsyncpa [#allocation4], 1
    %1167 = vsyncpa [#allocation10], 1

</llo_original>
